<compile_context>
chip_gen: v7x
topology: tpu7x:2x2x1
jax: 0.10.0
libtpu: 0.0.40
codegen_flags: <defaults>
</compile_context>

<pallas_src>
import jax
import jax.numpy as jnp
from jax import lax
from jax.experimental import pallas as pl
from jax.experimental.pallas import tpu as pltpu


def _attn_head_kernel(x_ref, w_ref, o_ref):
    # x_ref: (bb*T, E)  current batch chunk, flattened over (batch, time)
    # w_ref: (3, E, H)  stacked [Wq, Wk, Wv] (leading-axis split is lane-aligned)
    # o_ref: (bb, T, H)
    bb, T, H = o_ref.shape

    x = x_ref[...]                       # compute dtype (bf16 by default); no upcast

    # Three lane-aligned projections; f32 accumulation on the MXU.
    q = jnp.dot(x, w_ref[0], preferred_element_type=jnp.float32)   # (bb*T, H) f32
    k = jnp.dot(x, w_ref[1], preferred_element_type=jnp.float32)
    v = jnp.dot(x, w_ref[2], preferred_element_type=jnp.float32)

    # Scale q (O(T*H)) instead of the (T, T) score matrix (O(T^2)).
    q = q * (H ** -0.5)

    # (bb*T, H) -> (bb, T, H). q/k/v are f32, so T=8 rows align with the 8-row
    # sublane tile and this split is layout-free.
    q = q.reshape(bb, T, H)
    k = k.reshape(bb, T, H)
    v = v.reshape(bb, T, H)

    # Scores: q @ k^T without materializing k.T (contract head axes, batch on bb).
    s = lax.dot_general(q, k, (((2,), (2,)), ((0,), (0,))),
                        preferred_element_type=jnp.float32)        # (bb, T, T) f32

    # Causal (lower-triangular) mask. Finite, dtype-derived fill: never NaNs on
    # padded rows and cannot overflow if the score dtype ever changes.
    row = lax.broadcasted_iota(jnp.int32, (T, T), 0)
    col = lax.broadcasted_iota(jnp.int32, (T, T), 1)
    causal = (col <= row)[None, :, :]                               # (1, T, T)
    neg_fill = jnp.asarray(jnp.finfo(s.dtype).min, s.dtype)
    s = jnp.where(causal, s, neg_fill)

    # Softmax over the key axis, entirely in f32 (v5e has no bf16 VPU/EUP).
    m = jnp.max(s, axis=-1, keepdims=True)
    p = jnp.exp(s - m)
    denom = jnp.sum(p, axis=-1, keepdims=True)
    attn = p * pl.reciprocal(denom)      # exact reciprocal; EUP slot is idle anyway

    # attn @ v (batched), f32 accumulate.
    out = lax.dot_general(attn, v, (((2,), (1,)), ((0,), (0,))),
                          preferred_element_type=jnp.float32)       # (bb, T, H)

    o_ref[...] = out.astype(o_ref.dtype)


def self_attention_head(x, wq, wk, wv, *, num_chunks=1, compute_dtype=jnp.bfloat16):
    """Causal single-head self-attention.

    x: (B, T, E); wq/wk/wv: (E, H) (== nn.Linear(E, H, bias=False).weight.T).
    Returns (B, T, H) in x.dtype.

    num_chunks: grid steps over the batch. Default 1 (single step) — v5e/v6e have
      one TensorCore, so extra steps are pure overhead. Use 2 on v7x so both
      TensorCores get a chunk via the "parallel" grid axis.
    compute_dtype: dtype fed to the projection MXU matmuls (accumulation is
      always f32). bf16 is the MXU-native fast path; pass jnp.float32 for
      bit-accurate results.
    """
    B, T, E = x.shape
    H = wq.shape[1]

    assert num_chunks >= 1 and B % num_chunks == 0, (
        f"batch {B} must be divisible by num_chunks {num_chunks}")
    bb = B // num_chunks

    dt = x.dtype if compute_dtype is None else compute_dtype

    # Wrapper-side reshape of a contiguous array is free; avoids an in-kernel
    # (bb, T, E) -> (bb*T, E) ref merge that could materialize a VMEM copy.
    x2d = x.reshape(B * T, E).astype(dt)
    # One weight DMA, leading-axis (lane-aligned) split inside the kernel.
    w_qkv = jnp.stack([wq, wk, wv], axis=0).astype(dt)              # (3, E, H)

    return pl.pallas_call(
        _attn_head_kernel,
        out_shape=jax.ShapeDtypeStruct((B, T, H), x.dtype),
        grid_spec=pltpu.PrefetchScalarGridSpec(
            num_scalar_prefetch=0,
            grid=(num_chunks,),
            in_specs=[
                pl.BlockSpec((bb * T, E), lambda c: (c, 0)),
                pl.BlockSpec((3, E, H), lambda c: (0, 0, 0)),       # weights resident
            ],
            out_specs=pl.BlockSpec((bb, T, H), lambda c: (c, 0, 0)),
        ),
        compiler_params=pltpu.CompilerParams(
            dimension_semantics=("parallel",),
        ),
    )(x2d, w_qkv)


def _reference(x, wq, wk, wv):
    # Pure-JAX f32 reference matching the PyTorch forward (eval mode).
    q = x @ wq
    k = x @ wk
    v = x @ wv
    H = wq.shape[1]
    s = (q @ jnp.swapaxes(k, -2, -1)) * (H ** -0.5)
    T = x.shape[1]
    tril = jnp.tril(jnp.ones((T, T), dtype=bool))
    s = jnp.where(tril, s, -jnp.inf)
    w = jax.nn.softmax(s, axis=-1)
    return w @ v


if __name__ == "__main__":
    # Shapes consistent with the module:
    # embd_dim=32, context_size=8 (T=8), query_dim=16, dropout=0.1 (identity in eval).
    B, T, E, H = 2, 8, 32, 16

    key = jax.random.PRNGKey(0)
    kx, kq, kk, kv = jax.random.split(key, 4)

    x = jax.random.normal(kx, (B, T, E), dtype=jnp.float32)
    # nn.Linear default init: U(-1/sqrt(E), 1/sqrt(E)); stored here as (E, H) = weight.T
    bound = 1.0 / (E ** 0.5)
    wq = jax.random.uniform(kq, (E, H), jnp.float32, -bound, bound)
    wk = jax.random.uniform(kk, (E, H), jnp.float32, -bound, bound)
    wv = jax.random.uniform(kv, (E, H), jnp.float32, -bound, bound)

    ref = _reference(x, wq, wk, wv)

    # 1) f32 compute path: structural correctness at tight tolerance
    #    (exact reciprocal; only MXU f32 multi-pass / EUP exp rounding remains).
    out_f32 = jax.block_until_ready(
        self_attention_head(x, wq, wk, wv, compute_dtype=jnp.float32))
    assert out_f32.shape == (B, T, H)
    assert jnp.allclose(out_f32, ref, atol=1e-3, rtol=1e-3), \
        float(jnp.max(jnp.abs(out_f32 - ref)))

    # 2) Default bf16-operand path (MXU-native fast path per perf review);
    #    looser tolerance only because the projection operands are bf16.
    out_bf16 = jax.block_until_ready(self_attention_head(x, wq, wk, wv))
    assert out_bf16.shape == (B, T, H)
    assert jnp.allclose(out_bf16, ref, atol=5e-2, rtol=5e-2), \
        float(jnp.max(jnp.abs(out_bf16 - ref)))

    print("KERNEL_OK")
</pallas_src>

<mosaic_0001>
module attributes {stable_mosaic.version = 11 : i64} {
  func.func @_attn_head_kernel(%arg0: i32, %arg1: memref<16x32xf32, #tpu.memory_space<vmem>>, %arg2: memref<3x32x16xf32, #tpu.memory_space<vmem>>, %arg3: memref<2x8x16xf32, #tpu.memory_space<vmem>>) attributes {dimension_semantics = [#tpu.dimension_semantics<parallel>], iteration_bounds = array<i64: 1>, scalar_prefetch = 0 : i64, scratch_operands = 0 : i64, tpu.core_type = #tpu.core_type<tc>, window_params = [{transform_indices = @transform_0, window_bounds = array<i64: 16, 32>}, {pipeline_mode = #tpu.pipeline_mode<synchronous>, transform_indices = @transform_1, window_bounds = array<i64: 3, 32, 16>}, {transform_indices = @transform_2, window_bounds = array<i64: 2, 8, 16>}]} {
    %c0 = arith.constant 0 : index
    %c0_0 = arith.constant 0 : index
    %0 = vector.load %arg1[%c0, %c0_0] : memref<16x32xf32, #tpu.memory_space<vmem>>, vector<16x32xf32>
    %c0_1 = arith.constant 0 : index
    %c0_2 = arith.constant 0 : index
    %c0_3 = arith.constant 0 : index
    %1 = vector.load %arg2[%c0_1, %c0_2, %c0_3] : memref<3x32x16xf32, #tpu.memory_space<vmem>>, vector<1x32x16xf32>
    %2 = vector.shape_cast %1 : vector<1x32x16xf32> to vector<32x16xf32>
    %cst = arith.constant dense<0.000000e+00> : vector<16x16xf32>
    %3 = tpu.matmul %0, %2, %cst {dimension_numbers = #tpu.dot_dimension_numbers<[1], [0], [0], [1], [0, 0, 1, 1], [], []>} : vector<16x32xf32>, vector<32x16xf32>, vector<16x16xf32> -> vector<16x16xf32>
    %c1 = arith.constant 1 : index
    %c0_4 = arith.constant 0 : index
    %c0_5 = arith.constant 0 : index
    %4 = vector.load %arg2[%c1, %c0_4, %c0_5] : memref<3x32x16xf32, #tpu.memory_space<vmem>>, vector<1x32x16xf32>
    %5 = vector.shape_cast %4 : vector<1x32x16xf32> to vector<32x16xf32>
    %cst_6 = arith.constant dense<0.000000e+00> : vector<16x16xf32>
    %6 = tpu.matmul %0, %5, %cst_6 {dimension_numbers = #tpu.dot_dimension_numbers<[1], [0], [0], [1], [0, 0, 1, 1], [], []>} : vector<16x32xf32>, vector<32x16xf32>, vector<16x16xf32> -> vector<16x16xf32>
    %c2 = arith.constant 2 : index
    %c0_7 = arith.constant 0 : index
    %c0_8 = arith.constant 0 : index
    %7 = vector.load %arg2[%c2, %c0_7, %c0_8] : memref<3x32x16xf32, #tpu.memory_space<vmem>>, vector<1x32x16xf32>
    %8 = vector.shape_cast %7 : vector<1x32x16xf32> to vector<32x16xf32>
    %cst_9 = arith.constant dense<0.000000e+00> : vector<16x16xf32>
    %9 = tpu.matmul %0, %8, %cst_9 {dimension_numbers = #tpu.dot_dimension_numbers<[1], [0], [0], [1], [0, 0, 1, 1], [], []>} : vector<16x32xf32>, vector<32x16xf32>, vector<16x16xf32> -> vector<16x16xf32>
    %cst_10 = arith.constant 2.500000e-01 : f32
    %10 = vector.broadcast %cst_10 : f32 to vector<16x16xf32>
    %11 = arith.mulf %3, %10 : vector<16x16xf32>
    %12 = vector.shape_cast %11 : vector<16x16xf32> to vector<2x8x16xf32>
    %13 = vector.shape_cast %6 : vector<16x16xf32> to vector<2x8x16xf32>
    %14 = vector.shape_cast %9 : vector<16x16xf32> to vector<2x8x16xf32>
    %cst_11 = arith.constant dense<0.000000e+00> : vector<2x8x8xf32>
    %15 = tpu.matmul %12, %13, %cst_11 {dimension_numbers = #tpu.dot_dimension_numbers<[2], [2], [1], [1], [0, 0, 0, 1, 1, 1], [0], [0]>} : vector<2x8x16xf32>, vector<2x8x16xf32>, vector<2x8x8xf32> -> vector<2x8x8xf32>
    %16 = tpu.iota {dimensions = array<i32: 0>} : vector<8x8xi32>
    %17 = tpu.iota {dimensions = array<i32: 1>} : vector<8x8xi32>
    %18 = arith.cmpi sle, %17, %16 : vector<8x8xi32>
    %19 = vector.shape_cast %18 : vector<8x8xi1> to vector<1x8x8xi1>
    %cst_12 = arith.constant -3.40282347E+38 : f32
    %20 = vector.shape_cast %19 : vector<1x8x8xi1> to vector<1x8x8xi1>
    %21 = vector.broadcast %20 : vector<1x8x8xi1> to vector<2x8x8xi1>
    %22 = vector.broadcast %cst_12 : f32 to vector<2x8x8xf32>
    %23 = arith.select %21, %15, %22 : vector<2x8x8xi1>, vector<2x8x8xf32>
    %cst_13 = arith.constant dense<0xFF800000> : vector<2x8xf32>
    %24 = vector.multi_reduction <maximumf>, %23, %cst_13 [2] : vector<2x8x8xf32> to vector<2x8xf32>
    %25 = vector.shape_cast %24 : vector<2x8xf32> to vector<2x8x1xf32>
    %26 = vector.broadcast %25 : vector<2x8x1xf32> to vector<2x8x8xf32>
    %27 = arith.subf %23, %26 : vector<2x8x8xf32>
    %28 = math.exp %27 : vector<2x8x8xf32>
    %cst_14 = arith.constant dense<0.000000e+00> : vector<2x8xf32>
    %29 = vector.multi_reduction <add>, %28, %cst_14 [2] : vector<2x8x8xf32> to vector<2x8xf32>
    %30 = vector.shape_cast %29 : vector<2x8xf32> to vector<2x8x1xf32>
    %31 = tpu.reciprocal %30 : vector<2x8x1xf32> -> vector<2x8x1xf32>
    %32 = vector.broadcast %31 : vector<2x8x1xf32> to vector<2x8x8xf32>
    %33 = arith.mulf %28, %32 : vector<2x8x8xf32>
    %cst_15 = arith.constant dense<0.000000e+00> : vector<2x8x16xf32>
    %34 = tpu.matmul %33, %14, %cst_15 {dimension_numbers = #tpu.dot_dimension_numbers<[2], [1], [1], [2], [0, 0, 0, 1, 1, 2], [0], [0]>} : vector<2x8x8xf32>, vector<2x8x16xf32>, vector<2x8x16xf32> -> vector<2x8x16xf32>
    %c0_16 = arith.constant 0 : index
    %c0_17 = arith.constant 0 : index
    %c0_18 = arith.constant 0 : index
    %35 = vector.load %arg3[%c0_16, %c0_17, %c0_18] : memref<2x8x16xf32, #tpu.memory_space<vmem>>, vector<2x8x16xf32>
    tpu.vector_store %arg3[%c0_16, %c0_17, %c0_18], %34 {strides = array<i32>} : memref<2x8x16xf32, #tpu.memory_space<vmem>>, vector<2x8x16xf32>,
    return
  }
  func.func @transform_0(%arg0: i32) -> (i32, i32) {
    %c0_i32 = arith.constant 0 : i32
    %c0_i32_0 = arith.constant 0 : i32
    return %arg0, %c0_i32 : i32, i32
  }
  func.func @transform_1(%arg0: i32) -> (i32, i32, i32) {
    %c0_i32 = arith.constant 0 : i32
    %c0_i32_0 = arith.constant 0 : i32
    %c0_i32_1 = arith.constant 0 : i32
    %c0_i32_2 = arith.constant 0 : i32
    return %c0_i32, %c0_i32_0, %c0_i32_1 : i32, i32, i32
  }
  func.func @transform_2(%arg0: i32) -> (i32, i32, i32) {
    %c0_i32 = arith.constant 0 : i32
    %c0_i32_0 = arith.constant 0 : i32
    %c0_i32_1 = arith.constant 0 : i32
    return %arg0, %c0_i32, %c0_i32_0 : i32, i32, i32
  }
}

</mosaic_0001>

<llo_original>
// kernel: tpu_custom_call.1
$region0: #{tpu_custom_call.1}
  #allocation0 [shape = 'u32[]', space=smem, size = 0x4, offset = 0x4, fixed_abs, tag = 'smem constant byte address 0x4 - core index']
  #allocation1 [shape = 'u32[144,128]{1,0:T(1,128)}', space=vmem, size = 0x12000, scoped, tag = 'internal scratch']
  %s0 = inlined_call_operand.vmem [shape: f32[16,32], index: 0, kind: input, shape index: {}]
  %s1 = inlined_call_operand.vmem [shape: f32[3,32,16], index: 1, kind: input, shape index: {}]
  %s2 = inlined_call_operand.hbm [shape: f32[2,8,16], index: 2, kind: output, shape index: {}]
  %s3 = sld [smem:[#allocation0]]
  $region18: #{tpu_custom_call.1} parent=0
    _
  %s5 = ssub.s32 1, %s3
  %s6 = scalar_select 0, %s5, %s3
  $region1: #{tpu_custom_call.1} parent=0
    #allocation2 [shape = 'u8[8192]{0}', space=vmem, size = 0x2000, scoped, tag = 'output window, operand 0, single buffered']
    #allocation3 [shape = 's32[1]{0}', space=sflag, size = 0x4, scoped, tag = 'scoped memory for tpu_custom_call.1']
    %7 = vsyncpa [#allocation3], 0
    // Predicated region
    $region2: #{tpu_custom_call.1} parent=1 // pred_check
      _
    $region3: #{tpu_custom_call.1} parent=1 // pred_check_branch
      %9 = sbr.rel (0) target = $region5
    $region4: #{tpu_custom_call.1} parent=1 // pred_region
      _
    $region5: #{tpu_custom_call.1} parent=1 // pred_fallthru
      _
    // Predicated region
    $region6: #{tpu_custom_call.1} parent=1 // pred_check
      _
    $region7: #{tpu_custom_call.1} parent=1 // pred_check_branch
      %11 = sbr.rel (0) target = $region9
    $region8: #{tpu_custom_call.1} parent=1 // pred_region
      _
    $region9: #{tpu_custom_call.1} parent=1 // pred_fallthru
      _
    %v12 = vld [vmem:[%s0] sm:$0xff]
    %v13 = vld [vmem:[%s0 + $0x8] sm:$0xff]
    %v14 = vld [vmem:[%s1] sm:$0xff]
    %v15 = vld [vmem:[%s1 + $0x8] sm:$0xff]
    %v16 = vld [vmem:[%s1 + $0x10] sm:$0xff]
    %v17 = vld [vmem:[%s1 + $0x18] sm:$0xff]
    %vm18 = vcmask 261120
    %v20 = vsel %vm18, %v12, 0
    %v23 = vsel %vm18, %v13, 0
    %25 = vmatprep.subr.mxu0 0.0
    %26 = vmatpush1.msra.mxu0 %v14
    %27 = vmatprep.subr.mxu0 0.0
    %28 = vmatpush1.msra.mxu0 %v15
    %29 = vmatprep.subr.mxu0 0.0
    %30 = vmatpush1.msra.mxu0 %v16
    %31 = vmatprep.subr.mxu0 0.0
    %32 = vmatpush1.msra.mxu0 %v17
    %33 = vmatprep.subr.mxu0 0.0
    %34 = vmatpush1.msra.mxu0 0.0
    %35 = vmatprep.subr.mxu0 0.0
    %36 = vmatpush1.msra.mxu0 0.0
    %37 = vmatprep.subr.mxu0 0.0
    %38 = vmatpush1.msra.mxu0 0.0
    %39 = vmatprep.subr.mxu0 0.0
    %40 = vmatpush1.msra.mxu0 0.0
    %41 = vmatprep.subr.mxu0 0.0
    %42 = vmatpush1.msra.mxu0 0.0
    %43 = vmatprep.subr.mxu0 0.0
    %44 = vmatpush1.msra.mxu0 0.0
    %45 = vmatprep.subr.mxu0 0.0
    %46 = vmatpush1.msra.mxu0 0.0
    %47 = vmatprep.subr.mxu0 0.0
    %48 = vmatpush1.msra.mxu0 0.0
    %49 = vmatprep.subr.mxu0 0.0
    %50 = vmatpush1.msra.mxu0 0.0
    %51 = vmatprep.subr.mxu0 0.0
    %52 = vmatpush1.msra.mxu0 0.0
    %53 = vmatprep.subr.mxu0 0.0
    %54 = vmatpush1.msra.mxu0 0.0
    %55 = vmatprep.subr.mxu0 0.0
    %56 = vmatpush1.msra.mxu0 0.0
    %57 = vmatprep.subr.mxu0 0.0
    %58 = vmatpush1.msra.mxu0 0.0
    %59 = vmatprep.subr.mxu0 0.0
    %60 = vmatpush1.msra.mxu0 0.0
    %61 = vmatprep.subr.mxu0 0.0
    %62 = vmatpush1.msra.mxu0 0.0
    %63 = vmatprep.subr.mxu0 0.0
    %64 = vmatpush1.msra.mxu0 0.0
    %65 = vmatprep.subr.mxu0 0.0
    %66 = vmatpush1.msra.mxu0 0.0
    %67 = vmatprep.subr.mxu0 0.0
    %68 = vmatpush1.msra.mxu0 0.0
    %69 = vmatprep.subr.mxu0 0.0
    %70 = vmatpush1.msra.mxu0 0.0
    %71 = vmatprep.subr.mxu0 0.0
    %72 = vmatpush1.msra.mxu0 0.0
    %73 = vmatprep.subr.mxu0 0.0
    %74 = vmatpush1.msra.mxu0 0.0
    %75 = vmatprep.subr.mxu0 0.0
    %76 = vmatpush1.msra.mxu0 0.0
    %77 = vmatprep.subr.mxu0 0.0
    %78 = vmatpush1.msra.mxu0 0.0
    %79 = vmatprep.subr.mxu0 0.0
    %80 = vmatpush1.msra.mxu0 0.0
    %81 = vmatprep.subr.mxu0 0.0
    %82 = vmatpush1.msra.mxu0 0.0
    %83 = vmatprep.subr.mxu0 0.0
    %84 = vmatpush1.msra.mxu0 0.0
    %85 = vmatprep.subr.mxu0 0.0
    %86 = vmatpush1.msra.mxu0 0.0
    %87 = vmatprep.subr.mxu0 0.0
    %88 = vmatpush1.msra.mxu0 0.0
    %89 = vmatprep.mubr.f32.mxu0 0.0
    %90 = vmatmul.mubr.f32.gmra.mrb[0].mxu0 %v20
    %v91 = vpop.f32.mrb[0].mxu0
    %v92 = vadd.f32 0.0, %v91
    %v93 = vpop.f32.mrb[0].mxu0
    %94 = vmatprep.mubr.f32.mxu0 0.0
    %95 = vmatmul.mubr.f32.gmra.mrb[0].mxu0 %v23
    %v96 = vpop.f32.mrb[0].mxu0
    %v97 = vadd.f32 0.0, %v96
    %v98 = vpop.f32.mrb[0].mxu0
    %99 = vdwg.mxu0
    %s100 = scalar_lea.vmem %s1, 32
    %v101 = vld [vmem:[%s100] sm:$0xff]
    %v102 = vld [vmem:[%s100 + $0x8] sm:$0xff]
    %v103 = vld [vmem:[%s100 + $0x10] sm:$0xff]
    %v104 = vld [vmem:[%s100 + $0x18] sm:$0xff]
    %105 = vmatprep.subr.mxu0 0.0
    %106 = vmatpush1.msra.mxu0 %v101
    %107 = vmatprep.subr.mxu0 0.0
    %108 = vmatpush1.msra.mxu0 %v102
    %109 = vmatprep.subr.mxu0 0.0
    %110 = vmatpush1.msra.mxu0 %v103
    %111 = vmatprep.subr.mxu0 0.0
    %112 = vmatpush1.msra.mxu0 %v104
    %113 = vmatprep.subr.mxu0 0.0
    %114 = vmatpush1.msra.mxu0 0.0
    %115 = vmatprep.subr.mxu0 0.0
    %116 = vmatpush1.msra.mxu0 0.0
    %117 = vmatprep.subr.mxu0 0.0
    %118 = vmatpush1.msra.mxu0 0.0
    %119 = vmatprep.subr.mxu0 0.0
    %120 = vmatpush1.msra.mxu0 0.0
    %121 = vmatprep.subr.mxu0 0.0
    %122 = vmatpush1.msra.mxu0 0.0
    %123 = vmatprep.subr.mxu0 0.0
    %124 = vmatpush1.msra.mxu0 0.0
    %125 = vmatprep.subr.mxu0 0.0
    %126 = vmatpush1.msra.mxu0 0.0
    %127 = vmatprep.subr.mxu0 0.0
    %128 = vmatpush1.msra.mxu0 0.0
    %129 = vmatprep.subr.mxu0 0.0
    %130 = vmatpush1.msra.mxu0 0.0
    %131 = vmatprep.subr.mxu0 0.0
    %132 = vmatpush1.msra.mxu0 0.0
    %133 = vmatprep.subr.mxu0 0.0
    %134 = vmatpush1.msra.mxu0 0.0
    %135 = vmatprep.subr.mxu0 0.0
    %136 = vmatpush1.msra.mxu0 0.0
    %137 = vmatprep.subr.mxu0 0.0
    %138 = vmatpush1.msra.mxu0 0.0
    %139 = vmatprep.subr.mxu0 0.0
    %140 = vmatpush1.msra.mxu0 0.0
    %141 = vmatprep.subr.mxu0 0.0
    %142 = vmatpush1.msra.mxu0 0.0
    %143 = vmatprep.subr.mxu0 0.0
    %144 = vmatpush1.msra.mxu0 0.0
    %145 = vmatprep.subr.mxu0 0.0
    %146 = vmatpush1.msra.mxu0 0.0
    %147 = vmatprep.subr.mxu0 0.0
    %148 = vmatpush1.msra.mxu0 0.0
    %149 = vmatprep.subr.mxu0 0.0
    %150 = vmatpush1.msra.mxu0 0.0
    %151 = vmatprep.subr.mxu0 0.0
    %152 = vmatpush1.msra.mxu0 0.0
    %153 = vmatprep.subr.mxu0 0.0
    %154 = vmatpush1.msra.mxu0 0.0
    %155 = vmatprep.subr.mxu0 0.0
    %156 = vmatpush1.msra.mxu0 0.0
    %157 = vmatprep.subr.mxu0 0.0
    %158 = vmatpush1.msra.mxu0 0.0
    %159 = vmatprep.subr.mxu0 0.0
    %160 = vmatpush1.msra.mxu0 0.0
    %161 = vmatprep.subr.mxu0 0.0
    %162 = vmatpush1.msra.mxu0 0.0
    %163 = vmatprep.subr.mxu0 0.0
    %164 = vmatpush1.msra.mxu0 0.0
    %165 = vmatprep.subr.mxu0 0.0
    %166 = vmatpush1.msra.mxu0 0.0
    %167 = vmatprep.subr.mxu0 0.0
    %168 = vmatpush1.msra.mxu0 0.0
    %169 = vmatprep.mubr.f32.mxu0 0.0
    %170 = vmatmul.mubr.f32.gmra.mrb[0].mxu0 %v20
    %v171 = vpop.f32.mrb[0].mxu0
    %v172 = vadd.f32 0.0, %v171
    %v173 = vpop.f32.mrb[0].mxu0
    %174 = vmatprep.mubr.f32.mxu0 0.0
    %175 = vmatmul.mubr.f32.gmra.mrb[0].mxu0 %v23
    %v176 = vpop.f32.mrb[0].mxu0
    %v177 = vadd.f32 0.0, %v176
    %v178 = vpop.f32.mrb[0].mxu0
    %179 = vdwg.mxu0
    %s180 = scalar_lea.vmem %s1, 64
    %v181 = vld [vmem:[%s180] sm:$0xff]
    %v182 = vld [vmem:[%s180 + $0x8] sm:$0xff]
    %v183 = vld [vmem:[%s180 + $0x10] sm:$0xff]
    %v184 = vld [vmem:[%s180 + $0x18] sm:$0xff]
    %185 = vmatprep.subr.mxu0 0.0
    %186 = vmatpush1.msra.mxu0 %v181
    %187 = vmatprep.subr.mxu0 0.0
    %188 = vmatpush1.msra.mxu0 %v182
    %189 = vmatprep.subr.mxu0 0.0
    %190 = vmatpush1.msra.mxu0 %v183
    %191 = vmatprep.subr.mxu0 0.0
    %192 = vmatpush1.msra.mxu0 %v184
    %193 = vmatprep.subr.mxu0 0.0
    %194 = vmatpush1.msra.mxu0 0.0
    %195 = vmatprep.subr.mxu0 0.0
    %196 = vmatpush1.msra.mxu0 0.0
    %197 = vmatprep.subr.mxu0 0.0
    %198 = vmatpush1.msra.mxu0 0.0
    %199 = vmatprep.subr.mxu0 0.0
    %200 = vmatpush1.msra.mxu0 0.0
    %201 = vmatprep.subr.mxu0 0.0
    %202 = vmatpush1.msra.mxu0 0.0
    %203 = vmatprep.subr.mxu0 0.0
    %204 = vmatpush1.msra.mxu0 0.0
    %205 = vmatprep.subr.mxu0 0.0
    %206 = vmatpush1.msra.mxu0 0.0
    %207 = vmatprep.subr.mxu0 0.0
    %208 = vmatpush1.msra.mxu0 0.0
    %209 = vmatprep.subr.mxu0 0.0
    %210 = vmatpush1.msra.mxu0 0.0
    %211 = vmatprep.subr.mxu0 0.0
    %212 = vmatpush1.msra.mxu0 0.0
    %213 = vmatprep.subr.mxu0 0.0
    %214 = vmatpush1.msra.mxu0 0.0
    %215 = vmatprep.subr.mxu0 0.0
    %216 = vmatpush1.msra.mxu0 0.0
    %217 = vmatprep.subr.mxu0 0.0
    %218 = vmatpush1.msra.mxu0 0.0
    %219 = vmatprep.subr.mxu0 0.0
    %220 = vmatpush1.msra.mxu0 0.0
    %221 = vmatprep.subr.mxu0 0.0
    %222 = vmatpush1.msra.mxu0 0.0
    %223 = vmatprep.subr.mxu0 0.0
    %224 = vmatpush1.msra.mxu0 0.0
    %225 = vmatprep.subr.mxu0 0.0
    %226 = vmatpush1.msra.mxu0 0.0
    %227 = vmatprep.subr.mxu0 0.0
    %228 = vmatpush1.msra.mxu0 0.0
    %229 = vmatprep.subr.mxu0 0.0
    %230 = vmatpush1.msra.mxu0 0.0
    %231 = vmatprep.subr.mxu0 0.0
    %232 = vmatpush1.msra.mxu0 0.0
    %233 = vmatprep.subr.mxu0 0.0
    %234 = vmatpush1.msra.mxu0 0.0
    %235 = vmatprep.subr.mxu0 0.0
    %236 = vmatpush1.msra.mxu0 0.0
    %237 = vmatprep.subr.mxu0 0.0
    %238 = vmatpush1.msra.mxu0 0.0
    %239 = vmatprep.subr.mxu0 0.0
    %240 = vmatpush1.msra.mxu0 0.0
    %241 = vmatprep.subr.mxu0 0.0
    %242 = vmatpush1.msra.mxu0 0.0
    %243 = vmatprep.subr.mxu0 0.0
    %244 = vmatpush1.msra.mxu0 0.0
    %245 = vmatprep.subr.mxu0 0.0
    %246 = vmatpush1.msra.mxu0 0.0
    %247 = vmatprep.subr.mxu0 0.0
    %248 = vmatpush1.msra.mxu0 0.0
    %249 = vmatprep.mubr.f32.mxu0 0.0
    %250 = vmatmul.mubr.f32.gmra.mrb[0].mxu0 %v20
    %v251 = vpop.f32.mrb[0].mxu0
    %v252 = vadd.f32 0.0, %v251
    %v253 = vpop.f32.mrb[0].mxu0
    %254 = vmatprep.mubr.f32.mxu0 0.0
    %255 = vmatmul.mubr.f32.gmra.mrb[0].mxu0 %v23
    %v256 = vpop.f32.mrb[0].mxu0
    %v257 = vadd.f32 0.0, %v256
    %v258 = vpop.f32.mrb[0].mxu0
    %259 = vdwg.mxu0
    %v260 = vmul.f32 %v92, 0.25
    %v261 = vmul.f32 %v97, 0.25
    %vm262 = vcmask 130048
    %v264 = vsel %vm262, %v260, 0
    %v267 = vsel %vm262, %v172, 0
    %269 = vmatprep.subr.mxu0 0.0
    %270 = vmatpush1.xpose.msra.mxu0 %v267
    %271 = vmatprep.subr.mxu0 0.0
    %272 = vmatpush1.xpose.msra.mxu0 0.0
    %273 = vmatprep.subr.mxu0 0.0
    %274 = vmatpush1.xpose.msra.mxu0 0.0
    %275 = vmatprep.subr.mxu0 0.0
    %276 = vmatpush1.xpose.msra.mxu0 0.0
    %277 = vmatprep.subr.mxu0 0.0
    %278 = vmatpush1.xpose.msra.mxu0 0.0
    %279 = vmatprep.subr.mxu0 0.0
    %280 = vmatpush1.xpose.msra.mxu0 0.0
    %281 = vmatprep.subr.mxu0 0.0
    %282 = vmatpush1.xpose.msra.mxu0 0.0
    %283 = vmatprep.subr.mxu0 0.0
    %284 = vmatpush1.xpose.msra.mxu0 0.0
    %285 = vmatprep.subr.mxu0 0.0
    %286 = vmatpush1.xpose.msra.mxu0 0.0
    %287 = vmatprep.subr.mxu0 0.0
    %288 = vmatpush1.xpose.msra.mxu0 0.0
    %289 = vmatprep.subr.mxu0 0.0
    %290 = vmatpush1.xpose.msra.mxu0 0.0
    %291 = vmatprep.subr.mxu0 0.0
    %292 = vmatpush1.xpose.msra.mxu0 0.0
    %293 = vmatprep.subr.mxu0 0.0
    %294 = vmatpush1.xpose.msra.mxu0 0.0
    %295 = vmatprep.subr.mxu0 0.0
    %296 = vmatpush1.xpose.msra.mxu0 0.0
    %297 = vmatprep.subr.mxu0 0.0
    %298 = vmatpush1.xpose.msra.mxu0 0.0
    %299 = vmatprep.subr.mxu0 0.0
    %300 = vmatpush1.xpose.msra.mxu0 0.0
    %301 = vmatprep.subr.mxu0 0.0
    %302 = vmatpush1.xpose.msra.mxu0 0.0
    %303 = vmatprep.subr.mxu0 0.0
    %304 = vmatpush1.xpose.msra.mxu0 0.0
    %305 = vmatprep.subr.mxu0 0.0
    %306 = vmatpush1.xpose.msra.mxu0 0.0
    %307 = vmatprep.subr.mxu0 0.0
    %308 = vmatpush1.xpose.msra.mxu0 0.0
    %309 = vmatprep.subr.mxu0 0.0
    %310 = vmatpush1.xpose.msra.mxu0 0.0
    %311 = vmatprep.subr.mxu0 0.0
    %312 = vmatpush1.xpose.msra.mxu0 0.0
    %313 = vmatprep.subr.mxu0 0.0
    %314 = vmatpush1.xpose.msra.mxu0 0.0
    %315 = vmatprep.subr.mxu0 0.0
    %316 = vmatpush1.xpose.msra.mxu0 0.0
    %317 = vmatprep.subr.mxu0 0.0
    %318 = vmatpush1.xpose.msra.mxu0 0.0
    %319 = vmatprep.subr.mxu0 0.0
    %320 = vmatpush1.xpose.msra.mxu0 0.0
    %321 = vmatprep.subr.mxu0 0.0
    %322 = vmatpush1.xpose.msra.mxu0 0.0
    %323 = vmatprep.subr.mxu0 0.0
    %324 = vmatpush1.xpose.msra.mxu0 0.0
    %325 = vmatprep.subr.mxu0 0.0
    %326 = vmatpush1.xpose.msra.mxu0 0.0
    %327 = vmatprep.subr.mxu0 0.0
    %328 = vmatpush1.xpose.msra.mxu0 0.0
    %329 = vmatprep.subr.mxu0 0.0
    %330 = vmatpush1.xpose.msra.mxu0 0.0
    %331 = vmatprep.subr.mxu0 0.0
    %332 = vmatpush1.xpose.msra.mxu0 0.0
    %333 = vmatprep.mubr.f32.mxu0 0.0
    %334 = vmatmul.mubr.f32.gmra.mrb[0].mxu0 %v264
    %v335 = vpop.f32.mrb[0].mxu0
    %v336 = vadd.f32 0.0, %v335
    %v337 = vpop.f32.mrb[0].mxu0
    %338 = vdwg.mxu0
    %v340 = vsel %vm262, %v261, 0
    %v343 = vsel %vm262, %v177, 0
    %345 = vmatprep.subr.mxu0 0.0
    %346 = vmatpush1.xpose.msra.mxu0 %v343
    %347 = vmatprep.subr.mxu0 0.0
    %348 = vmatpush1.xpose.msra.mxu0 0.0
    %349 = vmatprep.subr.mxu0 0.0
    %350 = vmatpush1.xpose.msra.mxu0 0.0
    %351 = vmatprep.subr.mxu0 0.0
    %352 = vmatpush1.xpose.msra.mxu0 0.0
    %353 = vmatprep.subr.mxu0 0.0
    %354 = vmatpush1.xpose.msra.mxu0 0.0
    %355 = vmatprep.subr.mxu0 0.0
    %356 = vmatpush1.xpose.msra.mxu0 0.0
    %357 = vmatprep.subr.mxu0 0.0
    %358 = vmatpush1.xpose.msra.mxu0 0.0
    %359 = vmatprep.subr.mxu0 0.0
    %360 = vmatpush1.xpose.msra.mxu0 0.0
    %361 = vmatprep.subr.mxu0 0.0
    %362 = vmatpush1.xpose.msra.mxu0 0.0
    %363 = vmatprep.subr.mxu0 0.0
    %364 = vmatpush1.xpose.msra.mxu0 0.0
    %365 = vmatprep.subr.mxu0 0.0
    %366 = vmatpush1.xpose.msra.mxu0 0.0
    %367 = vmatprep.subr.mxu0 0.0
    %368 = vmatpush1.xpose.msra.mxu0 0.0
    %369 = vmatprep.subr.mxu0 0.0
    %370 = vmatpush1.xpose.msra.mxu0 0.0
    %371 = vmatprep.subr.mxu0 0.0
    %372 = vmatpush1.xpose.msra.mxu0 0.0
    %373 = vmatprep.subr.mxu0 0.0
    %374 = vmatpush1.xpose.msra.mxu0 0.0
    %375 = vmatprep.subr.mxu0 0.0
    %376 = vmatpush1.xpose.msra.mxu0 0.0
    %377 = vmatprep.subr.mxu0 0.0
    %378 = vmatpush1.xpose.msra.mxu0 0.0
    %379 = vmatprep.subr.mxu0 0.0
    %380 = vmatpush1.xpose.msra.mxu0 0.0
    %381 = vmatprep.subr.mxu0 0.0
    %382 = vmatpush1.xpose.msra.mxu0 0.0
    %383 = vmatprep.subr.mxu0 0.0
    %384 = vmatpush1.xpose.msra.mxu0 0.0
    %385 = vmatprep.subr.mxu0 0.0
    %386 = vmatpush1.xpose.msra.mxu0 0.0
    %387 = vmatprep.subr.mxu0 0.0
    %388 = vmatpush1.xpose.msra.mxu0 0.0
    %389 = vmatprep.subr.mxu0 0.0
    %390 = vmatpush1.xpose.msra.mxu0 0.0
    %391 = vmatprep.subr.mxu0 0.0
    %392 = vmatpush1.xpose.msra.mxu0 0.0
    %393 = vmatprep.subr.mxu0 0.0
    %394 = vmatpush1.xpose.msra.mxu0 0.0
    %395 = vmatprep.subr.mxu0 0.0
    %396 = vmatpush1.xpose.msra.mxu0 0.0
    %397 = vmatprep.subr.mxu0 0.0
    %398 = vmatpush1.xpose.msra.mxu0 0.0
    %399 = vmatprep.subr.mxu0 0.0
    %400 = vmatpush1.xpose.msra.mxu0 0.0
    %401 = vmatprep.subr.mxu0 0.0
    %402 = vmatpush1.xpose.msra.mxu0 0.0
    %403 = vmatprep.subr.mxu0 0.0
    %404 = vmatpush1.xpose.msra.mxu0 0.0
    %405 = vmatprep.subr.mxu0 0.0
    %406 = vmatpush1.xpose.msra.mxu0 0.0
    %407 = vmatprep.subr.mxu0 0.0
    %408 = vmatpush1.xpose.msra.mxu0 0.0
    %409 = vmatprep.mubr.f32.mxu0 0.0
    %410 = vmatmul.mubr.f32.gmra.mrb[0].mxu0 %v340
    %v411 = vpop.f32.mrb[0].mxu0
    %v412 = vadd.f32 0.0, %v411
    %v413 = vpop.f32.mrb[0].mxu0
    %414 = vdwg.mxu0
    %v415 = vlaneseq
    %v416 = vshrl.u32 %v415, 7
    %v417 = vlaneseq
    %v418 = vand.u32 %v417, 127
    %vm419 = vcmp.le.s32.totalorder %v418, %v416
    %v420 = vsel %vm419, 1, 0
    %vm421 = vcmp.eq.s32.totalorder %v420, 1
    %v422 = vsel %vm421, %v336, -3.4028235e+38
    %v423 = vsel %vm421, %v412, -3.4028235e+38
    %vm424 = vcmask 64512
    %v425 = vsel %vm424, %v422, -inf
    %426 = vmax.xlane.f32.xlu0 %v425
    %v427 = vpop.xlane.xlu0 %426
    %v428 = vsel %vm424, %v423, -inf
    %429 = vmax.xlane.f32.xlu0 %v428
    %v430 = vpop.xlane.xlu0 %429
    %v431 = vsub.f32 %v422, %v427
    %v432 = vsub.f32 %v423, %v430
    %v433 = vmul.f32 %v431, 1.442695
    %v434 = vpow.pop %v433
    %v435 = vmul.f32 %v432, 1.442695
    %v436 = vpow.pop %v435
    %v437 = vsel %vm424, %v434, 0.0
    %438 = vadd.xlane.f32.xlu0 %v437
    %v439 = vpop.xlane.xlu0 %438
    %v440 = vsel %vm424, %v436, 0.0
    %441 = vadd.xlane.f32.xlu0 %v440
    %v442 = vpop.xlane.xlu0 %441
    %v443 = vrcp.pop %v439
    %v444 = vrcp.pop %v442
    %v445 = vmul.f32 %v434, %v443
    %v446 = vmul.f32 %v436, %v444
    %v448 = vsel %vm424, %v445, 0
    %450 = vmatprep.subr.mxu0 0.0
    %451 = vmatpush1.msra.mxu0 %v252
    %452 = vmatprep.subr.mxu0 0.0
    %453 = vmatpush1.msra.mxu0 0.0
    %454 = vmatprep.subr.mxu0 0.0
    %455 = vmatpush1.msra.mxu0 0.0
    %456 = vmatprep.subr.mxu0 0.0
    %457 = vmatpush1.msra.mxu0 0.0
    %458 = vmatprep.subr.mxu0 0.0
    %459 = vmatpush1.msra.mxu0 0.0
    %460 = vmatprep.subr.mxu0 0.0
    %461 = vmatpush1.msra.mxu0 0.0
    %462 = vmatprep.subr.mxu0 0.0
    %463 = vmatpush1.msra.mxu0 0.0
    %464 = vmatprep.subr.mxu0 0.0
    %465 = vmatpush1.msra.mxu0 0.0
    %466 = vmatprep.subr.mxu0 0.0
    %467 = vmatpush1.msra.mxu0 0.0
    %468 = vmatprep.subr.mxu0 0.0
    %469 = vmatpush1.msra.mxu0 0.0
    %470 = vmatprep.subr.mxu0 0.0
    %471 = vmatpush1.msra.mxu0 0.0
    %472 = vmatprep.subr.mxu0 0.0
    %473 = vmatpush1.msra.mxu0 0.0
    %474 = vmatprep.subr.mxu0 0.0
    %475 = vmatpush1.msra.mxu0 0.0
    %476 = vmatprep.subr.mxu0 0.0
    %477 = vmatpush1.msra.mxu0 0.0
    %478 = vmatprep.subr.mxu0 0.0
    %479 = vmatpush1.msra.mxu0 0.0
    %480 = vmatprep.subr.mxu0 0.0
    %481 = vmatpush1.msra.mxu0 0.0
    %482 = vmatprep.subr.mxu0 0.0
    %483 = vmatpush1.msra.mxu0 0.0
    %484 = vmatprep.subr.mxu0 0.0
    %485 = vmatpush1.msra.mxu0 0.0
    %486 = vmatprep.subr.mxu0 0.0
    %487 = vmatpush1.msra.mxu0 0.0
    %488 = vmatprep.subr.mxu0 0.0
    %489 = vmatpush1.msra.mxu0 0.0
    %490 = vmatprep.subr.mxu0 0.0
    %491 = vmatpush1.msra.mxu0 0.0
    %492 = vmatprep.subr.mxu0 0.0
    %493 = vmatpush1.msra.mxu0 0.0
    %494 = vmatprep.subr.mxu0 0.0
    %495 = vmatpush1.msra.mxu0 0.0
    %496 = vmatprep.subr.mxu0 0.0
    %497 = vmatpush1.msra.mxu0 0.0
    %498 = vmatprep.subr.mxu0 0.0
    %499 = vmatpush1.msra.mxu0 0.0
    %500 = vmatprep.subr.mxu0 0.0
    %501 = vmatpush1.msra.mxu0 0.0
    %502 = vmatprep.subr.mxu0 0.0
    %503 = vmatpush1.msra.mxu0 0.0
    %504 = vmatprep.subr.mxu0 0.0
    %505 = vmatpush1.msra.mxu0 0.0
    %506 = vmatprep.subr.mxu0 0.0
    %507 = vmatpush1.msra.mxu0 0.0
    %508 = vmatprep.subr.mxu0 0.0
    %509 = vmatpush1.msra.mxu0 0.0
    %510 = vmatprep.subr.mxu0 0.0
    %511 = vmatpush1.msra.mxu0 0.0
    %512 = vmatprep.subr.mxu0 0.0
    %513 = vmatpush1.msra.mxu0 0.0
    %514 = vmatprep.mubr.f32.mxu0 0.0
    %515 = vmatmul.mubr.f32.gmra.mrb[0].mxu0 %v448
    %v516 = vpop.f32.mrb[0].mxu0
    %v517 = vadd.f32 0.0, %v516
    %v518 = vpop.f32.mrb[0].mxu0
    %519 = vdwg.mxu0
    %v521 = vsel %vm424, %v446, 0
    %523 = vmatprep.subr.mxu0 0.0
    %524 = vmatpush1.msra.mxu0 %v257
    %525 = vmatprep.subr.mxu0 0.0
    %526 = vmatpush1.msra.mxu0 0.0
    %527 = vmatprep.subr.mxu0 0.0
    %528 = vmatpush1.msra.mxu0 0.0
    %529 = vmatprep.subr.mxu0 0.0
    %530 = vmatpush1.msra.mxu0 0.0
    %531 = vmatprep.subr.mxu0 0.0
    %532 = vmatpush1.msra.mxu0 0.0
    %533 = vmatprep.subr.mxu0 0.0
    %534 = vmatpush1.msra.mxu0 0.0
    %535 = vmatprep.subr.mxu0 0.0
    %536 = vmatpush1.msra.mxu0 0.0
    %537 = vmatprep.subr.mxu0 0.0
    %538 = vmatpush1.msra.mxu0 0.0
    %539 = vmatprep.subr.mxu0 0.0
    %540 = vmatpush1.msra.mxu0 0.0
    %541 = vmatprep.subr.mxu0 0.0
    %542 = vmatpush1.msra.mxu0 0.0
    %543 = vmatprep.subr.mxu0 0.0
    %544 = vmatpush1.msra.mxu0 0.0
    %545 = vmatprep.subr.mxu0 0.0
    %546 = vmatpush1.msra.mxu0 0.0
    %547 = vmatprep.subr.mxu0 0.0
    %548 = vmatpush1.msra.mxu0 0.0
    %549 = vmatprep.subr.mxu0 0.0
    %550 = vmatpush1.msra.mxu0 0.0
    %551 = vmatprep.subr.mxu0 0.0
    %552 = vmatpush1.msra.mxu0 0.0
    %553 = vmatprep.subr.mxu0 0.0
    %554 = vmatpush1.msra.mxu0 0.0
    %555 = vmatprep.subr.mxu0 0.0
    %556 = vmatpush1.msra.mxu0 0.0
    %557 = vmatprep.subr.mxu0 0.0
    %558 = vmatpush1.msra.mxu0 0.0
    %559 = vmatprep.subr.mxu0 0.0
    %560 = vmatpush1.msra.mxu0 0.0
    %561 = vmatprep.subr.mxu0 0.0
    %562 = vmatpush1.msra.mxu0 0.0
    %563 = vmatprep.subr.mxu0 0.0
    %564 = vmatpush1.msra.mxu0 0.0
    %565 = vmatprep.subr.mxu0 0.0
    %566 = vmatpush1.msra.mxu0 0.0
    %567 = vmatprep.subr.mxu0 0.0
    %568 = vmatpush1.msra.mxu0 0.0
    %569 = vmatprep.subr.mxu0 0.0
    %570 = vmatpush1.msra.mxu0 0.0
    %571 = vmatprep.subr.mxu0 0.0
    %572 = vmatpush1.msra.mxu0 0.0
    %573 = vmatprep.subr.mxu0 0.0
    %574 = vmatpush1.msra.mxu0 0.0
    %575 = vmatprep.subr.mxu0 0.0
    %576 = vmatpush1.msra.mxu0 0.0
    %577 = vmatprep.subr.mxu0 0.0
    %578 = vmatpush1.msra.mxu0 0.0
    %579 = vmatprep.subr.mxu0 0.0
    %580 = vmatpush1.msra.mxu0 0.0
    %581 = vmatprep.subr.mxu0 0.0
    %582 = vmatpush1.msra.mxu0 0.0
    %583 = vmatprep.subr.mxu0 0.0
    %584 = vmatpush1.msra.mxu0 0.0
    %585 = vmatprep.subr.mxu0 0.0
    %586 = vmatpush1.msra.mxu0 0.0
    %587 = vmatprep.mubr.f32.mxu0 0.0
    %588 = vmatmul.mubr.f32.gmra.mrb[0].mxu0 %v521
    %v589 = vpop.f32.mrb[0].mxu0
    %v590 = vadd.f32 0.0, %v589
    %v591 = vpop.f32.mrb[0].mxu0
    %592 = vdwg.mxu0
    %593 = vst.msk [vmem:[#allocation2] sm:$0xff] %vm262, %v517
    %594 = vst.msk [vmem:[#allocation2 + $0x8] sm:$0xff] %vm262, %v590
    // Predicated region
    $region10: #{tpu_custom_call.1} parent=1 // pred_check
      _
    $region11: #{tpu_custom_call.1} parent=1 // pred_check_branch
      %596 = sbr.rel (0) target = $region13
    $region12: #{tpu_custom_call.1} parent=1 // pred_region
      %s598 = ssub.s32 256, 256
      %599 = vsyncadd [#allocation3], %s598
      %s600 = sshll.u32 [#allocation2], 4
      %s601 = int_to_ptr.vmem [resolvable:$true] %s600
      %606 = dma.vmem_to_hbm [thread:$0]  %s601, 256, %s2, [#allocation3], 128, 128, 8
    $region13: #{tpu_custom_call.1} parent=1 // pred_fallthru
      _
    // Predicated region
    $region14: #{tpu_custom_call.1} parent=1 // pred_check
      _
    $region15: #{tpu_custom_call.1} parent=1 // pred_check_branch
      %608 = sbr.rel (0) target = $region17
    $region16: #{tpu_custom_call.1} parent=1 // pred_region
      %609 = dma.done [#allocation3], 256
    $region17: #{tpu_custom_call.1} parent=1 // pred_fallthru
      _
    %610 = vsyncpa [#allocation3], 1

</llo_original>
